<compile_context>
chip_gen: v6e
topology: v6e:2x2x1
jax: 0.10.0
libtpu: 0.0.40
codegen_flags: <defaults>
</compile_context>

<pallas_src>
import functools

import jax
import jax.numpy as jnp
from jax import lax
from jax.experimental import pallas as pl
from jax.experimental.pallas import tpu as pltpu

_MIB = 1 << 20


def _attn_kernel(h_ref, e_ref, o_ref, *, tk_actual, tk_padded):
    # h_ref: (nb, tq, H), e_ref: (nb, Tk_pad, H), o_ref: (nb, tq, Tk_pad)
    h = h_ref[...]
    e = e_ref[...]

    # energy = hidden @ encoder^T, expressed as a contraction over the shared
    # last (H) dim of both operands -> no XLU transpose of the encoder tile;
    # MXU accumulates in f32 regardless of input dtype.
    energy = jnp.einsum(
        "bqh,bkh->bqk", h, e, preferred_element_type=jnp.float32
    )  # (nb, tq, Tk_pad) f32

    if tk_padded != tk_actual:
        # Lane-padded key columns must not contribute to the softmax.
        col = lax.broadcasted_iota(jnp.int32, energy.shape, dimension=2)
        energy = jnp.where(col < tk_actual, energy, -jnp.inf)

    # Numerically-stable softmax over the key axis. Exact divide: the kernel is
    # HBM-writeback-bound, so the EUP-approx reciprocal saves nothing measurable
    # and exact division keeps parity with torch.softmax.
    m = jnp.max(energy, axis=-1, keepdims=True)
    p = jnp.exp(energy - m)
    denom = jnp.sum(p, axis=-1, keepdims=True)
    # NOTE: when Tq % tq != 0 the trailing q-block computes on undefined rows;
    # those rows are discarded on writeback (all ops here are row-independent).
    o_ref[...] = (p / denom).astype(o_ref.dtype)


def _vmem_budget_bytes():
    """Generation-aware working-set budget and scoped-VMEM limit to request."""
    try:
        cap = pltpu.get_tpu_info().vmem_capacity_bytes
    except Exception:  # non-TPU / interpret-mode fallback
        cap = 128 * _MIB
    if cap >= 128 * _MIB:          # v5e / v6e (128 MiB physical VMEM)
        budget = 48 * _MIB
    elif cap >= 64 * _MIB:         # v7x (64 MiB per TC, both TCs active)
        budget = 28 * _MIB
    else:
        budget = max(8 * _MIB, cap // 3)
    limit = min(budget + 8 * _MIB, cap - 4 * _MIB)
    return budget, int(limit)


def _round_down(x, m):
    return max(m, (x // m) * m)


def _pick_tiles(B, Tq, Tk_pad, H, in_bytes, out_bytes, budget):
    """Pick (nb, tq, enc_bufs) whose honest VMEM footprint fits the budget."""

    def footprint(nb, tq, enc_bufs):
        io = (2 * nb * tq * H * in_bytes                # query tile, double-buffered
              + enc_bufs * nb * Tk_pad * H * in_bytes   # encoder block
              + 2 * nb * tq * Tk_pad * out_bytes)       # output tile, double-buffered
        interm = 3 * nb * tq * Tk_pad * 4               # f32 energy / p / select temps
        return io + interm + 1 * _MIB                   # compiler-internal scratch

    # Query tile: full Tq when small, else a 256-aligned tile (MXU M dimension).
    tq = Tq if Tq <= 512 else 512

    # Batch blocking: with a tiny Tq (decoder-style attention) one batch per grid
    # step degenerates to a GEMV plus ~0.35 us/step overhead; block batches so
    # each step sees roughly >= 256 query rows.
    nb = 1
    if tq == Tq:
        nb = max(1, min(B, 256 // max(tq, 1)))
        while nb > 1 and B % nb != 0:
            nb -= 1

    enc_bufs = 2
    while footprint(nb, tq, enc_bufs) > budget and nb > 1:
        nb = max(1, nb // 2)
        while nb > 1 and B % nb != 0:
            nb -= 1
    while footprint(nb, tq, enc_bufs) > budget and tq > 8:
        nxt = tq // 2
        tq = _round_down(nxt, 256) if nxt >= 256 else _round_down(nxt, 8)
    if footprint(nb, tq, enc_bufs) > budget:
        # The encoder block is resident across all q steps of a batch block;
        # drop its second pipeline buffer (one exposed DMA per batch boundary).
        enc_bufs = 1
    return nb, tq, enc_bufs


def attn_dot(hidden, encoder_outputs, *, out_dtype=None, compute_dtype=None):
    """Pallas TPU forward for Attn(method='dot').

    hidden: (B, Tq, H), encoder_outputs: (B, Tk, H)
      -> softmax(hidden @ encoder_outputs^T, axis=-1): (B, Tq, Tk)

    out_dtype / compute_dtype are optional (numerics-visible) bf16 overrides to
    halve HBM writeback / run the MXU at its bf16 rate; defaults keep precision.
    """
    B, Tq, H = hidden.shape
    Bk, Tk, Hk = encoder_outputs.shape
    assert B == Bk and H == Hk, "batch / hidden dims must match"

    if compute_dtype is not None:
        hidden = hidden.astype(compute_dtype)
        encoder_outputs = encoder_outputs.astype(compute_dtype)
    in_dtype = jnp.result_type(hidden.dtype, encoder_outputs.dtype)
    out_dtype = in_dtype if out_dtype is None else jnp.dtype(out_dtype)
    in_bytes = jnp.dtype(in_dtype).itemsize
    out_bytes = jnp.dtype(out_dtype).itemsize

    # Lane-dense output: pad the key axis (output lane dim) to a multiple of 128
    # so stores are unmasked full-vreg vst's; padded columns are masked to -inf
    # in the kernel and sliced off afterwards.
    Tk_pad = ((Tk + 127) // 128) * 128
    if Tk_pad != Tk:
        encoder_outputs = jnp.pad(
            encoder_outputs, ((0, 0), (0, Tk_pad - Tk), (0, 0)))

    budget, vmem_limit = _vmem_budget_bytes()
    nb, tq, enc_bufs = _pick_tiles(B, Tq, Tk_pad, H, in_bytes, out_bytes, budget)

    grid = (pl.cdiv(B, nb), pl.cdiv(Tq, tq))

    q_spec = pl.BlockSpec((nb, tq, H), lambda b, q: (b, q, 0))
    if enc_bufs == 1:
        e_spec = pl.BlockSpec((nb, Tk_pad, H), lambda b, q: (b, 0, 0),
                              pipeline_mode=pl.Buffered(1))
    else:
        e_spec = pl.BlockSpec((nb, Tk_pad, H), lambda b, q: (b, 0, 0))
    o_spec = pl.BlockSpec((nb, tq, Tk_pad), lambda b, q: (b, q, 0))

    cost = pl.CostEstimate(
        flops=2 * B * Tq * Tk_pad * H,
        transcendentals=B * Tq * Tk_pad,
        bytes_accessed=(B * Tq * H * in_bytes
                        + B * Tk_pad * H * in_bytes
                        + B * Tq * Tk_pad * out_bytes),
    )

    kernel = functools.partial(_attn_kernel, tk_actual=Tk, tk_padded=Tk_pad)

    out = pl.pallas_call(
        kernel,
        out_shape=jax.ShapeDtypeStruct((B, Tq, Tk_pad), out_dtype),
        grid_spec=pltpu.PrefetchScalarGridSpec(
            num_scalar_prefetch=0,
            grid=grid,
            in_specs=[q_spec, e_spec],
            out_specs=o_spec,
        ),
        compiler_params=pltpu.CompilerParams(
            dimension_semantics=("parallel", "parallel"),
            vmem_limit_bytes=vmem_limit,
        ),
        cost_estimate=cost,
    )(hidden, encoder_outputs)

    if Tk_pad != Tk:
        out = out[:, :, :Tk]
    return out


def attn_dot_ref(hidden, encoder_outputs):
    """Pure-JAX reference matching torch semantics."""
    energy = jnp.einsum("bqh,bkh->bqk",
                        hidden.astype(jnp.float32),
                        encoder_outputs.astype(jnp.float32))
    return jax.nn.softmax(energy, axis=-1)


if __name__ == "__main__":
    # Small, deterministic example shapes (no learned params in this module).
    B, Tq, Tk, H = 2, 8, 8, 32

    key = jax.random.PRNGKey(0)
    k1, k2 = jax.random.split(key)
    hidden = jax.random.normal(k1, (B, Tq, H), dtype=jnp.float32)
    encoder_outputs = jax.random.normal(k2, (B, Tk, H), dtype=jnp.float32)

    attn = jax.jit(attn_dot, static_argnames=("out_dtype", "compute_dtype"))
    out = attn(hidden, encoder_outputs)
    out = jax.block_until_ready(out)

    ref = attn_dot_ref(hidden, encoder_outputs)
    assert out.shape == (B, Tq, Tk)
    assert jnp.allclose(out.astype(jnp.float32), ref, atol=1e-4, rtol=1e-4), \
        "mismatch vs reference"
    # Exact divide -> rows of the softmax sum to 1 tightly.
    assert jnp.allclose(jnp.sum(out.astype(jnp.float32), axis=-1), 1.0, atol=1e-5)

    print("KERNEL_OK")
</pallas_src>

<mosaic_0001>
module attributes {stable_mosaic.version = 11 : i64} {
  func.func @_attn_kernel(%arg0: i32, %arg1: i32, %arg2: memref<2x8x32xf32, #tpu.memory_space<vmem>>, %arg3: memref<2x128x32xf32, #tpu.memory_space<vmem>>, %arg4: memref<2x8x128xf32, #tpu.memory_space<vmem>>) attributes {dimension_semantics = [#tpu.dimension_semantics<parallel>, #tpu.dimension_semantics<parallel>], iteration_bounds = array<i64: 1, 1>, scalar_prefetch = 0 : i64, scratch_operands = 0 : i64, tpu.core_type = #tpu.core_type<tc>, window_params = [{transform_indices = @transform_0, window_bounds = array<i64: 2, 8, 32>}, {transform_indices = @transform_1, window_bounds = array<i64: 2, 128, 32>}, {transform_indices = @transform_2, window_bounds = array<i64: 2, 8, 128>}]} {
    %c0 = arith.constant 0 : index
    %c0_0 = arith.constant 0 : index
    %c0_1 = arith.constant 0 : index
    %0 = vector.load %arg2[%c0, %c0_0, %c0_1] : memref<2x8x32xf32, #tpu.memory_space<vmem>>, vector<2x8x32xf32>
    %c0_2 = arith.constant 0 : index
    %c0_3 = arith.constant 0 : index
    %c0_4 = arith.constant 0 : index
    %1 = vector.load %arg3[%c0_2, %c0_3, %c0_4] : memref<2x128x32xf32, #tpu.memory_space<vmem>>, vector<2x128x32xf32>
    "tpu.trace_start"() <{level = 10 : i32, message = "bqh,bkh->bqk"}> : () -> ()
    %cst = arith.constant dense<0.000000e+00> : vector<2x8x128xf32>
    %2 = tpu.matmul %0, %1, %cst {dimension_numbers = #tpu.dot_dimension_numbers<[2], [2], [1], [1], [0, 0, 0, 1, 1, 1], [0], [0]>} : vector<2x8x32xf32>, vector<2x128x32xf32>, vector<2x8x128xf32> -> vector<2x8x128xf32>
    "tpu.trace_stop"() : () -> ()
    %3 = tpu.iota {dimensions = array<i32: 2>} : vector<2x8x128xi32>
    %c8_i32 = arith.constant 8 : i32
    %4 = vector.broadcast %c8_i32 : i32 to vector<2x8x128xi32>
    %5 = arith.cmpi slt, %3, %4 : vector<2x8x128xi32>
    %cst_5 = arith.constant 0xFF800000 : f32
    %6 = vector.broadcast %cst_5 : f32 to vector<2x8x128xf32>
    %7 = arith.select %5, %2, %6 : vector<2x8x128xi1>, vector<2x8x128xf32>
    %cst_6 = arith.constant dense<0xFF800000> : vector<2x8xf32>
    %8 = vector.multi_reduction <maximumf>, %7, %cst_6 [2] : vector<2x8x128xf32> to vector<2x8xf32>
    %9 = vector.shape_cast %8 : vector<2x8xf32> to vector<2x8x1xf32>
    %10 = vector.broadcast %9 : vector<2x8x1xf32> to vector<2x8x128xf32>
    %11 = arith.subf %7, %10 : vector<2x8x128xf32>
    %12 = math.exp %11 : vector<2x8x128xf32>
    %cst_7 = arith.constant dense<0.000000e+00> : vector<2x8xf32>
    %13 = vector.multi_reduction <add>, %12, %cst_7 [2] : vector<2x8x128xf32> to vector<2x8xf32>
    %14 = vector.shape_cast %13 : vector<2x8xf32> to vector<2x8x1xf32>
    %15 = vector.broadcast %14 : vector<2x8x1xf32> to vector<2x8x128xf32>
    %16 = arith.divf %12, %15 : vector<2x8x128xf32>
    %c0_8 = arith.constant 0 : index
    %c0_9 = arith.constant 0 : index
    %c0_10 = arith.constant 0 : index
    %17 = vector.load %arg4[%c0_8, %c0_9, %c0_10] : memref<2x8x128xf32, #tpu.memory_space<vmem>>, vector<2x8x128xf32>
    tpu.vector_store %arg4[%c0_8, %c0_9, %c0_10], %16 {strides = array<i32>} : memref<2x8x128xf32, #tpu.memory_space<vmem>>, vector<2x8x128xf32>,
    return
  }
  func.func @transform_0(%arg0: i32, %arg1: i32) -> (i32, i32, i32) {
    %c0_i32 = arith.constant 0 : i32
    %c0_i32_0 = arith.constant 0 : i32
    return %arg0, %arg1, %c0_i32 : i32, i32, i32
  }
  func.func @transform_1(%arg0: i32, %arg1: i32) -> (i32, i32, i32) {
    %c0_i32 = arith.constant 0 : i32
    %c0_i32_0 = arith.constant 0 : i32
    %c0_i32_1 = arith.constant 0 : i32
    return %arg0, %c0_i32, %c0_i32_0 : i32, i32, i32
  }
  func.func @transform_2(%arg0: i32, %arg1: i32) -> (i32, i32, i32) {
    %c0_i32 = arith.constant 0 : i32
    %c0_i32_0 = arith.constant 0 : i32
    return %arg0, %arg1, %c0_i32 : i32, i32, i32
  }
}

</mosaic_0001>

<llo_original>
// kernel: attn_dot.1
$region0: #{attn_dot.1}
  #allocation0 [shape = 'u32[]', space=smem, size = 0x4, offset = 0x4, fixed_abs, tag = 'smem constant byte address 0x4 - core index']
  #allocation1 [shape = 'u32[144,128]{1,0:T(1,128)}', space=vmem, size = 0x12000, scoped, tag = 'internal scratch']
  %s0 = inlined_call_operand.vmem [shape: f32[2,8,32], index: 0, kind: input, shape index: {}]
  %s1 = inlined_call_operand.vmem [shape: f32[2,128,32], index: 1, kind: input, shape index: {}]
  %s2 = inlined_call_operand.hbm [shape: f32[2,8,128], index: 2, kind: output, shape index: {}]
  %s3 = sld [smem:[#allocation0]]
  $region18: #{attn_dot.1} parent=0
    _
  %s5 = ssub.s32 1, %s3
  %s6 = scalar_select 0, %s5, %s3
  $region1: #{attn_dot.1} parent=0
    #allocation2 [shape = 'u8[8192]{0}', space=vmem, size = 0x2000, scoped, tag = 'output window, operand 0, single buffered']
    #allocation3 [shape = 's32[1]{0}', space=sflag, size = 0x4, scoped, tag = 'scoped memory for attn_dot.1']
    %7 = vsyncpa [#allocation3], 0
    // Predicated region
    $region2: #{attn_dot.1} parent=1 // pred_check
      _
    $region3: #{attn_dot.1} parent=1 // pred_check_branch
      %9 = sbr.rel (0) target = $region5
    $region4: #{attn_dot.1} parent=1 // pred_region
      _
    $region5: #{attn_dot.1} parent=1 // pred_fallthru
      _
    // Predicated region
    $region6: #{attn_dot.1} parent=1 // pred_check
      _
    $region7: #{attn_dot.1} parent=1 // pred_check_branch
      %11 = sbr.rel (0) target = $region9
    $region8: #{attn_dot.1} parent=1 // pred_region
      _
    $region9: #{attn_dot.1} parent=1 // pred_fallthru
      _
    %v12 = vld [vmem:[%s0] sm:$0xff]
    %v13 = vld [vmem:[%s0 + $0x8] sm:$0xff]
    %v14 = vld [vmem:[%s1] sm:$0xff]
    %v15 = vld [vmem:[%s1 + $0x8] sm:$0xff]
    %v16 = vld [vmem:[%s1 + $0x10] sm:$0xff]
    %v17 = vld [vmem:[%s1 + $0x18] sm:$0xff]
    %v18 = vld [vmem:[%s1 + $0x20] sm:$0xff]
    %v19 = vld [vmem:[%s1 + $0x28] sm:$0xff]
    %v20 = vld [vmem:[%s1 + $0x30] sm:$0xff]
    %v21 = vld [vmem:[%s1 + $0x38] sm:$0xff]
    %v22 = vld [vmem:[%s1 + $0x40] sm:$0xff]
    %v23 = vld [vmem:[%s1 + $0x48] sm:$0xff]
    %v24 = vld [vmem:[%s1 + $0x50] sm:$0xff]
    %v25 = vld [vmem:[%s1 + $0x58] sm:$0xff]
    %v26 = vld [vmem:[%s1 + $0x60] sm:$0xff]
    %v27 = vld [vmem:[%s1 + $0x68] sm:$0xff]
    %v28 = vld [vmem:[%s1 + $0x70] sm:$0xff]
    %v29 = vld [vmem:[%s1 + $0x78] sm:$0xff]
    %v30 = vld [vmem:[%s1 + $0x80] sm:$0xff]
    %v31 = vld [vmem:[%s1 + $0x88] sm:$0xff]
    %v32 = vld [vmem:[%s1 + $0x90] sm:$0xff]
    %v33 = vld [vmem:[%s1 + $0x98] sm:$0xff]
    %v34 = vld [vmem:[%s1 + $0xa0] sm:$0xff]
    %v35 = vld [vmem:[%s1 + $0xa8] sm:$0xff]
    %v36 = vld [vmem:[%s1 + $0xb0] sm:$0xff]
    %v37 = vld [vmem:[%s1 + $0xb8] sm:$0xff]
    %v38 = vld [vmem:[%s1 + $0xc0] sm:$0xff]
    %v39 = vld [vmem:[%s1 + $0xc8] sm:$0xff]
    %v40 = vld [vmem:[%s1 + $0xd0] sm:$0xff]
    %v41 = vld [vmem:[%s1 + $0xd8] sm:$0xff]
    %v42 = vld [vmem:[%s1 + $0xe0] sm:$0xff]
    %v43 = vld [vmem:[%s1 + $0xe8] sm:$0xff]
    %v44 = vld [vmem:[%s1 + $0xf0] sm:$0xff]
    %v45 = vld [vmem:[%s1 + $0xf8] sm:$0xff]
    %vm46 = vcmask 261120
    %v48 = vsel %vm46, %v12, 0
    %v51 = vsel %vm46, %v14, 0
    %v54 = vsel %vm46, %v15, 0
    %v57 = vsel %vm46, %v16, 0
    %v60 = vsel %vm46, %v17, 0
    %v63 = vsel %vm46, %v18, 0
    %v66 = vsel %vm46, %v19, 0
    %v69 = vsel %vm46, %v20, 0
    %v72 = vsel %vm46, %v21, 0
    %v75 = vsel %vm46, %v22, 0
    %v78 = vsel %vm46, %v23, 0
    %v81 = vsel %vm46, %v24, 0
    %v84 = vsel %vm46, %v25, 0
    %v87 = vsel %vm46, %v26, 0
    %v90 = vsel %vm46, %v27, 0
    %v93 = vsel %vm46, %v28, 0
    %v96 = vsel %vm46, %v29, 0
    %98 = vmatprep.subr.mxu0 0.0
    %99 = vmatpush1.xpose.msra.mxu0 %v96
    %100 = vmatprep.subr.mxu0 0.0
    %101 = vmatpush1.xpose.msra.mxu0 %v93
    %102 = vmatprep.subr.mxu0 0.0
    %103 = vmatpush1.xpose.msra.mxu0 %v90
    %104 = vmatprep.subr.mxu0 0.0
    %105 = vmatpush1.xpose.msra.mxu0 %v87
    %106 = vmatprep.subr.mxu0 0.0
    %107 = vmatpush1.xpose.msra.mxu0 %v84
    %108 = vmatprep.subr.mxu0 0.0
    %109 = vmatpush1.xpose.msra.mxu0 %v81
    %110 = vmatprep.subr.mxu0 0.0
    %111 = vmatpush1.xpose.msra.mxu0 %v78
    %112 = vmatprep.subr.mxu0 0.0
    %113 = vmatpush1.xpose.msra.mxu0 %v75
    %114 = vmatprep.subr.mxu0 0.0
    %115 = vmatpush1.xpose.msra.mxu0 %v72
    %116 = vmatprep.subr.mxu0 0.0
    %117 = vmatpush1.xpose.msra.mxu0 %v69
    %118 = vmatprep.subr.mxu0 0.0
    %119 = vmatpush1.xpose.msra.mxu0 %v66
    %120 = vmatprep.subr.mxu0 0.0
    %121 = vmatpush1.xpose.msra.mxu0 %v63
    %122 = vmatprep.subr.mxu0 0.0
    %123 = vmatpush1.xpose.msra.mxu0 %v60
    %124 = vmatprep.subr.mxu0 0.0
    %125 = vmatpush1.xpose.msra.mxu0 %v57
    %126 = vmatprep.subr.mxu0 0.0
    %127 = vmatpush1.xpose.msra.mxu0 %v54
    %128 = vmatprep.subr.mxu0 0.0
    %129 = vmatpush1.xpose.msra.mxu0 %v51
    %130 = vmatprep.subr.mxu0 0.0
    %131 = vmatpush2.xpose.msra.mxu0 0.0
    %132 = vmatprep.subr.mxu0 0.0
    %133 = vmatpush2.xpose.msra.mxu0 0.0
    %134 = vmatprep.subr.mxu0 0.0
    %135 = vmatpush2.xpose.msra.mxu0 0.0
    %136 = vmatprep.subr.mxu0 0.0
    %137 = vmatpush2.xpose.msra.mxu0 0.0
    %138 = vmatprep.subr.mxu0 0.0
    %139 = vmatpush2.xpose.msra.mxu0 0.0
    %140 = vmatprep.subr.mxu0 0.0
    %141 = vmatpush2.xpose.msra.mxu0 0.0
    %142 = vmatprep.subr.mxu0 0.0
    %143 = vmatpush2.xpose.msra.mxu0 0.0
    %144 = vmatprep.subr.mxu0 0.0
    %145 = vmatpush2.xpose.msra.mxu0 0.0
    %146 = vmatprep.subr.mxu0 0.0
    %147 = vmatpush2.xpose.msra.mxu0 0.0
    %148 = vmatprep.subr.mxu0 0.0
    %149 = vmatpush2.xpose.msra.mxu0 0.0
    %150 = vmatprep.subr.mxu0 0.0
    %151 = vmatpush2.xpose.msra.mxu0 0.0
    %152 = vmatprep.subr.mxu0 0.0
    %153 = vmatpush2.xpose.msra.mxu0 0.0
    %154 = vmatprep.subr.mxu0 0.0
    %155 = vmatpush2.xpose.msra.mxu0 0.0
    %156 = vmatprep.subr.mxu0 0.0
    %157 = vmatpush2.xpose.msra.mxu0 0.0
    %158 = vmatprep.subr.mxu0 0.0
    %159 = vmatpush2.xpose.msra.mxu0 0.0
    %160 = vmatprep.subr.mxu0 0.0
    %161 = vmatpush2.xpose.msra.mxu0 0.0
    %162 = vmatprep.mubr.f32.mxu0 0.0
    %163 = vmatmul.mubr.f32.gmra.mxu0 %v48
    %v164 = vpop.f32.mrf.mxu0
    %v165 = vadd.f32 0.0, %v164
    %v166 = vpop.f32.mrf.mxu0
    %167 = vdwg.mxu0
    %v169 = vsel %vm46, %v13, 0
    %v172 = vsel %vm46, %v30, 0
    %v175 = vsel %vm46, %v31, 0
    %v178 = vsel %vm46, %v32, 0
    %v181 = vsel %vm46, %v33, 0
    %v184 = vsel %vm46, %v34, 0
    %v187 = vsel %vm46, %v35, 0
    %v190 = vsel %vm46, %v36, 0
    %v193 = vsel %vm46, %v37, 0
    %v196 = vsel %vm46, %v38, 0
    %v199 = vsel %vm46, %v39, 0
    %v202 = vsel %vm46, %v40, 0
    %v205 = vsel %vm46, %v41, 0
    %v208 = vsel %vm46, %v42, 0
    %v211 = vsel %vm46, %v43, 0
    %v214 = vsel %vm46, %v44, 0
    %v217 = vsel %vm46, %v45, 0
    %219 = vmatprep.subr.mxu0 0.0
    %220 = vmatpush1.xpose.msra.mxu0 %v217
    %221 = vmatprep.subr.mxu0 0.0
    %222 = vmatpush1.xpose.msra.mxu0 %v214
    %223 = vmatprep.subr.mxu0 0.0
    %224 = vmatpush1.xpose.msra.mxu0 %v211
    %225 = vmatprep.subr.mxu0 0.0
    %226 = vmatpush1.xpose.msra.mxu0 %v208
    %227 = vmatprep.subr.mxu0 0.0
    %228 = vmatpush1.xpose.msra.mxu0 %v205
    %229 = vmatprep.subr.mxu0 0.0
    %230 = vmatpush1.xpose.msra.mxu0 %v202
    %231 = vmatprep.subr.mxu0 0.0
    %232 = vmatpush1.xpose.msra.mxu0 %v199
    %233 = vmatprep.subr.mxu0 0.0
    %234 = vmatpush1.xpose.msra.mxu0 %v196
    %235 = vmatprep.subr.mxu0 0.0
    %236 = vmatpush1.xpose.msra.mxu0 %v193
    %237 = vmatprep.subr.mxu0 0.0
    %238 = vmatpush1.xpose.msra.mxu0 %v190
    %239 = vmatprep.subr.mxu0 0.0
    %240 = vmatpush1.xpose.msra.mxu0 %v187
    %241 = vmatprep.subr.mxu0 0.0
    %242 = vmatpush1.xpose.msra.mxu0 %v184
    %243 = vmatprep.subr.mxu0 0.0
    %244 = vmatpush1.xpose.msra.mxu0 %v181
    %245 = vmatprep.subr.mxu0 0.0
    %246 = vmatpush1.xpose.msra.mxu0 %v178
    %247 = vmatprep.subr.mxu0 0.0
    %248 = vmatpush1.xpose.msra.mxu0 %v175
    %249 = vmatprep.subr.mxu0 0.0
    %250 = vmatpush1.xpose.msra.mxu0 %v172
    %251 = vmatprep.subr.mxu0 0.0
    %252 = vmatpush2.xpose.msra.mxu0 0.0
    %253 = vmatprep.subr.mxu0 0.0
    %254 = vmatpush2.xpose.msra.mxu0 0.0
    %255 = vmatprep.subr.mxu0 0.0
    %256 = vmatpush2.xpose.msra.mxu0 0.0
    %257 = vmatprep.subr.mxu0 0.0
    %258 = vmatpush2.xpose.msra.mxu0 0.0
    %259 = vmatprep.subr.mxu0 0.0
    %260 = vmatpush2.xpose.msra.mxu0 0.0
    %261 = vmatprep.subr.mxu0 0.0
    %262 = vmatpush2.xpose.msra.mxu0 0.0
    %263 = vmatprep.subr.mxu0 0.0
    %264 = vmatpush2.xpose.msra.mxu0 0.0
    %265 = vmatprep.subr.mxu0 0.0
    %266 = vmatpush2.xpose.msra.mxu0 0.0
    %267 = vmatprep.subr.mxu0 0.0
    %268 = vmatpush2.xpose.msra.mxu0 0.0
    %269 = vmatprep.subr.mxu0 0.0
    %270 = vmatpush2.xpose.msra.mxu0 0.0
    %271 = vmatprep.subr.mxu0 0.0
    %272 = vmatpush2.xpose.msra.mxu0 0.0
    %273 = vmatprep.subr.mxu0 0.0
    %274 = vmatpush2.xpose.msra.mxu0 0.0
    %275 = vmatprep.subr.mxu0 0.0
    %276 = vmatpush2.xpose.msra.mxu0 0.0
    %277 = vmatprep.subr.mxu0 0.0
    %278 = vmatpush2.xpose.msra.mxu0 0.0
    %279 = vmatprep.subr.mxu0 0.0
    %280 = vmatpush2.xpose.msra.mxu0 0.0
    %281 = vmatprep.subr.mxu0 0.0
    %282 = vmatpush2.xpose.msra.mxu0 0.0
    %283 = vmatprep.mubr.f32.mxu0 0.0
    %284 = vmatmul.mubr.f32.gmra.mxu0 %v169
    %v285 = vpop.f32.mrf.mxu0
    %v286 = vadd.f32 0.0, %v285
    %v287 = vpop.f32.mrf.mxu0
    %288 = vdwg.mxu0
    %v289 = vlaneseq
    %v290 = vand.u32 %v289, 127
    %vm291 = vcmp.lt.s32.totalorder %v290, 8
    %v292 = vsel %vm291, %v165, -inf
    %v293 = vsel %vm291, %v286, -inf
    %294 = vmax.xlane.f32.xlu0 %v292
    %v295 = vpop.xlane.xlu0 %294
    %296 = vmax.xlane.f32.xlu0 %v293
    %v297 = vpop.xlane.xlu0 %296
    %v298 = vsub.f32 %v292, %v295
    %v299 = vsub.f32 %v293, %v297
    %v300 = vmul.f32 %v298, 1.442695
    %v301 = vpow.pop %v300
    %v302 = vmul.f32 %v299, 1.442695
    %v303 = vpow.pop %v302
    %304 = vadd.xlane.f32.xlu0 %v301
    %v305 = vpop.xlane.xlu0 %304
    %306 = vadd.xlane.f32.xlu0 %v303
    %v307 = vpop.xlane.xlu0 %306
    %v308 = vrcp.pop %v305
    %v309 = vmul.f32 %v301, %v308
    %v310 = vrcp.pop %v307
    %v311 = vmul.f32 %v303, %v310
    %312 = vst [vmem:[#allocation2] sm:$0xff] %v309
    %313 = vst [vmem:[#allocation2 + $0x8] sm:$0xff] %v311
    // Predicated region
    $region10: #{attn_dot.1} parent=1 // pred_check
      _
    $region11: #{attn_dot.1} parent=1 // pred_check_branch
      %315 = sbr.rel (0) target = $region13
    $region12: #{attn_dot.1} parent=1 // pred_region
      %s317 = ssub.s32 256, 256
      %318 = vsyncadd [#allocation3], %s317
      %s319 = sshll.u32 [#allocation2], 4
      %s320 = int_to_ptr.vmem [resolvable:$true] %s319
      %325 = dma.vmem_to_hbm [thread:$0]  %s320, 256, %s2, [#allocation3], 128, 128, 8
    $region13: #{attn_dot.1} parent=1 // pred_fallthru
      _
    // Predicated region
    $region14: #{attn_dot.1} parent=1 // pred_check
      _
    $region15: #{attn_dot.1} parent=1 // pred_check_branch
      %327 = sbr.rel (0) target = $region17
    $region16: #{attn_dot.1} parent=1 // pred_region
      %328 = dma.done [#allocation3], 256
    $region17: #{attn_dot.1} parent=1 // pred_fallthru
      _
    %329 = vsyncpa [#allocation3], 1

</llo_original>
